<compile_context>
chip_gen: v5e
topology: v5e:2x2
jax: 0.10.0
libtpu: 0.0.40
codegen_flags: <defaults>
</compile_context>

<pallas_src>
import functools

import jax
import jax.numpy as jnp
from jax.experimental import pallas as pl
from jax.experimental.pallas import tpu as pltpu

# ---- hyper-parameters implied by the module ------------------------------
KSIZE = 5          # opts_conv kernel_size
STRIDE = 2         # opts_conv stride
PAD = 4            # opts_conv padding ('zeros')
LEAK = 0.02        # nn.LeakyReLU(0.02)
BN_EPS = 1e-5      # opt.eps (argparse value not given; torch default used)
CHANNELS = [16, 32, 64, 128]

LANE = 128         # TPU lane width: Cout / K are padded to this
SUBLANE = 8
COUT_PAD = 128     # lane-dense output channels for every layer
TM_MAX = 512       # target M-tile (rows) for the tiled matmul


def _round_up(x, m):
    return (x + m - 1) // m * m


def _pad2d(a, rows, cols):
    return jnp.pad(a, ((0, rows - a.shape[0]), (0, cols - a.shape[1])))


def _conv_out_size(s):
    return (s + 2 * PAD - KSIZE) // STRIDE + 1


# --------------------------------------------------------------------------
# Pallas kernels
# --------------------------------------------------------------------------
def _conv_mm_kernel(p_ref, w_ref, b_ref, y_ref, *, leak):
    """y = LeakyReLU(patches @ w + b).  bf16 MXU inputs, f32 accumulate."""
    z = jnp.dot(p_ref[...], w_ref[...], preferred_element_type=jnp.float32)
    z = z + b_ref[...]
    y_ref[...] = jnp.maximum(z, leak * z)


def _conv_mm_stats_kernel(p_ref, w_ref, b_ref, y_ref, s1_ref, s2_ref, *,
                          leak, m_valid, tm):
    """Same as _conv_mm_kernel, plus per-channel sum / sum-of-squares of the
    activation accumulated across the M grid axis (masked to valid rows) for
    the training-mode BatchNorm that follows the nonlinearity."""
    i = pl.program_id(0)
    z = jnp.dot(p_ref[...], w_ref[...], preferred_element_type=jnp.float32)
    z = z + b_ref[...]
    y = jnp.maximum(z, leak * z)
    y_ref[...] = y

    # Mask out padded rows so the batch statistics only cover the M valid rows.
    row = i * tm + jax.lax.broadcasted_iota(jnp.int32, (tm, 1), 0)
    mask = (row < m_valid).astype(jnp.float32)
    ym = y * mask

    @pl.when(i == 0)
    def _():
        s1_ref[...] = jnp.zeros_like(s1_ref)
        s2_ref[...] = jnp.zeros_like(s2_ref)

    s1_ref[...] += jnp.sum(ym, axis=0, keepdims=True)
    s2_ref[...] += jnp.sum(ym * ym, axis=0, keepdims=True)


def _bn_affine_kernel(y_ref, ss_ref, o_ref):
    """o = y * scale + shift  (BatchNorm folded into per-channel scale/shift)."""
    o_ref[...] = y_ref[...] * ss_ref[0:1, :] + ss_ref[1:2, :]


def _linear_kernel(x_ref, w_ref, b_ref, o_ref):
    """o = x @ w + b  (nn.Linear with w already transposed to (in, out))."""
    o_ref[...] = (
        jnp.dot(x_ref[...], w_ref[...], preferred_element_type=jnp.float32)
        + b_ref[...]
    )


# --------------------------------------------------------------------------
# pallas_call wrappers (M-tiled, weight VMEM-resident, lane-dense outputs)
# --------------------------------------------------------------------------
def _conv_mm(patches, w_pad, bias, *, use_bn):
    M, _ = patches.shape
    K_pad = w_pad.shape[0]
    TM = min(TM_MAX, _round_up(M, SUBLANE))
    M_pad = _round_up(M, TM)
    grid_m = M_pad // TM

    p = _pad2d(patches, M_pad, K_pad)     # bf16, zero rows/cols

    in_specs = [
        pl.BlockSpec((TM, K_pad), lambda i: (i, 0)),        # patch tile (pipelined)
        pl.BlockSpec((K_pad, COUT_PAD), lambda i: (0, 0)),  # weight, VMEM-resident
        pl.BlockSpec((1, COUT_PAD), lambda i: (0, 0)),      # bias
    ]

    if use_bn:
        y, s1, s2 = pl.pallas_call(
            functools.partial(_conv_mm_stats_kernel, leak=LEAK, m_valid=M, tm=TM),
            out_shape=(
                jax.ShapeDtypeStruct((M_pad, COUT_PAD), jnp.float32),
                jax.ShapeDtypeStruct((1, COUT_PAD), jnp.float32),
                jax.ShapeDtypeStruct((1, COUT_PAD), jnp.float32),
            ),
            grid=(grid_m,),
            in_specs=in_specs,
            out_specs=(
                pl.BlockSpec((TM, COUT_PAD), lambda i: (i, 0)),
                pl.BlockSpec((1, COUT_PAD), lambda i: (0, 0)),   # sum   (accumulator)
                pl.BlockSpec((1, COUT_PAD), lambda i: (0, 0)),   # sumsq (accumulator)
            ),
            compiler_params=pltpu.CompilerParams(
                dimension_semantics=("arbitrary",)),   # stats reduce over M
        )(p, w_pad, bias)
        return y, s1, s2, TM, grid_m

    y = pl.pallas_call(
        functools.partial(_conv_mm_kernel, leak=LEAK),
        out_shape=jax.ShapeDtypeStruct((M_pad, COUT_PAD), jnp.float32),
        grid=(grid_m,),
        in_specs=in_specs,
        out_specs=pl.BlockSpec((TM, COUT_PAD), lambda i: (i, 0)),
        compiler_params=pltpu.CompilerParams(
            dimension_semantics=("parallel",)),        # independent M tiles
    )(p, w_pad, bias)
    return y, None, None, TM, grid_m


def _bn_apply(y, scale_shift, TM, grid_m):
    M_pad = y.shape[0]
    return pl.pallas_call(
        _bn_affine_kernel,
        out_shape=jax.ShapeDtypeStruct((M_pad, COUT_PAD), jnp.float32),
        grid=(grid_m,),
        in_specs=[pl.BlockSpec((TM, COUT_PAD), lambda i: (i, 0)),
                  pl.BlockSpec((2, COUT_PAD), lambda i: (0, 0))],
        out_specs=pl.BlockSpec((TM, COUT_PAD), lambda i: (i, 0)),
        compiler_params=pltpu.CompilerParams(dimension_semantics=("parallel",)),
    )(y, scale_shift)


def linear(x, w_pad, bias, latent_dim):
    B, _ = x.shape
    F_pad, D_pad = w_pad.shape
    TB = min(256, _round_up(B, SUBLANE))
    B_pad = _round_up(B, TB)
    x_p = _pad2d(x.astype(jnp.bfloat16), B_pad, F_pad)
    out = pl.pallas_call(
        _linear_kernel,
        out_shape=jax.ShapeDtypeStruct((B_pad, D_pad), jnp.float32),
        grid=(B_pad // TB,),
        in_specs=[pl.BlockSpec((TB, F_pad), lambda i: (i, 0)),
                  pl.BlockSpec((F_pad, D_pad), lambda i: (0, 0)),
                  pl.BlockSpec((1, D_pad), lambda i: (0, 0))],
        out_specs=pl.BlockSpec((TB, D_pad), lambda i: (i, 0)),
        compiler_params=pltpu.CompilerParams(dimension_semantics=("parallel",)),
    )(x_p, w_pad, bias)
    return out[:B, :latent_dim]


# --------------------------------------------------------------------------
# JAX glue: padding + im2col patch extraction (data rearrangement only)
# --------------------------------------------------------------------------
def im2col(x_nhwc):
    """Patch matrix (M, 25*C) in bf16 for the MXU.
    TODO(synk): patches are still materialized by XLA in HBM; generating them
    per M-tile inside the kernel (manual DMA over the padded NHWC input) would
    cut conv-layer HBM traffic a further ~6x at large sizes."""
    x = x_nhwc.astype(jnp.bfloat16)
    B, H, W, C = x.shape
    xp = jnp.pad(x, ((0, 0), (PAD, PAD), (PAD, PAD), (0, 0)))
    Hp, Wp = H + 2 * PAD, W + 2 * PAD
    Ho = (Hp - KSIZE) // STRIDE + 1
    Wo = (Wp - KSIZE) // STRIDE + 1
    cols = []
    for ky in range(KSIZE):
        for kx in range(KSIZE):
            cols.append(
                xp[:, ky:ky + STRIDE * Ho:STRIDE, kx:kx + STRIDE * Wo:STRIDE, :])
    patches = jnp.stack(cols, axis=3)                    # (B, Ho, Wo, 25, C)
    return patches.reshape(B * Ho * Wo, KSIZE * KSIZE * C), B, Ho, Wo


def conv_layer(x_nhwc, layer):
    patches, B, Ho, Wo = im2col(x_nhwc)
    M = patches.shape[0]
    cout = layer["cout"]

    y, s1, s2, TM, grid_m = _conv_mm(
        patches, layer["w"], layer["b"], use_bn=layer["bn"])

    if layer["bn"]:
        # Fold training-mode batch statistics into per-channel scale/shift
        # (tiny (1, 128) glue math), then apply with a tiled affine kernel.
        # TODO(synk): running_mean/running_var (eval mode) are not tracked.
        mean = s1 / M
        var = jnp.maximum(s2 / M - mean * mean, 0.0)     # biased var, as torch BN
        scale = layer["gamma"] * jax.lax.rsqrt(var + BN_EPS)
        shift = layer["beta"] - mean * scale
        y = _bn_apply(y, jnp.concatenate([scale, shift], axis=0), TM, grid_m)

    return y[:M, :cout].reshape(B, Ho, Wo, cout)


# --------------------------------------------------------------------------
# Parameter init (deterministic, shapes from the module's __init__)
# --------------------------------------------------------------------------
def init_params(key, in_channels, img_size, latent_dim):
    params = {"convs": []}
    cins = [in_channels] + CHANNELS[:-1]
    s = img_size
    for li, (cin, cout) in enumerate(zip(cins, CHANNELS)):
        key, kw = jax.random.split(key)
        k = KSIZE * KSIZE * cin
        k_pad = _round_up(k, LANE)
        # torch layout (Cout, Cin, kh, kw) -> (kh, kw, Cin, Cout) -> flat (K, Cout)
        w_t = jax.random.normal(kw, (cout, cin, KSIZE, KSIZE), jnp.float32)
        w_t = w_t * (1.0 / jnp.sqrt(cin * KSIZE * KSIZE))
        w = jnp.transpose(w_t, (2, 3, 1, 0)).reshape(k, cout)
        params["convs"].append(dict(
            w=_pad2d(w, k_pad, COUT_PAD).astype(jnp.bfloat16),   # bf16 MXU input
            b=_pad2d(jnp.zeros((1, cout), jnp.float32), 1, COUT_PAD),
            gamma=_pad2d(jnp.ones((1, cout), jnp.float32), 1, COUT_PAD),
            beta=_pad2d(jnp.zeros((1, cout), jnp.float32), 1, COUT_PAD),
            bn=(li != 0),      # conv1 has bn=False
            cout=cout,
        ))
        s = _conv_out_size(s)

    # TODO(synk): the original module sets Linear in_features to
    # channels[3] * (img_size // 16) ** 2, which does not equal the actual
    # flattened conv4 size for k=5/s=2/p=4; we size the Linear to the actual
    # flattened output so the forward pass is runnable.
    flat = CHANNELS[-1] * s * s
    f_pad = _round_up(flat, LANE)
    d_pad = _round_up(latent_dim, LANE)
    key, kl = jax.random.split(key)
    lw = jax.random.normal(kl, (latent_dim, flat), jnp.float32)
    lw = lw * (1.0 / jnp.sqrt(flat))
    params["lin_w"] = _pad2d(jnp.transpose(lw), f_pad, d_pad).astype(jnp.bfloat16)
    params["lin_b"] = _pad2d(jnp.zeros((1, latent_dim), jnp.float32), 1, d_pad)
    params["latent_dim"] = latent_dim
    return params


# --------------------------------------------------------------------------
# Encoder forward
# --------------------------------------------------------------------------
def encoder_forward(params, img_nchw):
    # NCHW -> NHWC for the conv pipeline
    x = jnp.transpose(img_nchw, (0, 2, 3, 1)).astype(jnp.float32)
    for layer in params["convs"]:
        x = conv_layer(x, layer)
    # match torch's out.view(B, -1): flatten in (C, H, W) order
    flat = jnp.transpose(x, (0, 3, 1, 2)).reshape(x.shape[0], -1)
    return linear(flat, params["lin_w"], params["lin_b"], params["latent_dim"])


if __name__ == "__main__":
    B, Cin, H, W = 2, 4, 16, 16          # opt.channels=4, opt.img_size=16
    latent_dim = 32                      # opt.latent_dim

    key = jax.random.PRNGKey(0)
    k_img, k_par = jax.random.split(key)
    img = jax.random.normal(k_img, (B, Cin, H, W), jnp.float32)

    params = init_params(k_par, Cin, H, latent_dim)
    z = encoder_forward(params, img)
    z = jax.block_until_ready(z)
    assert z.shape == (B, latent_dim)
    print("KERNEL_OK")
</pallas_src>

<mosaic_0001>
module attributes {stable_mosaic.version = 11 : i64} {
  func.func @_conv_mm_kernel(%arg0: i32, %arg1: memref<200x128xbf16, #tpu.memory_space<vmem>>, %arg2: memref<128x128xbf16, #tpu.memory_space<vmem>>, %arg3: memref<1x128xf32, #tpu.memory_space<vmem>>, %arg4: memref<200x128xf32, #tpu.memory_space<vmem>>) attributes {dimension_semantics = [#tpu.dimension_semantics<parallel>], iteration_bounds = array<i64: 1>, scalar_prefetch = 0 : i64, scratch_operands = 0 : i64, tpu.core_type = #tpu.core_type<tc>, window_params = [{transform_indices = @transform_0, window_bounds = array<i64: 200, 128>}, {pipeline_mode = #tpu.pipeline_mode<synchronous>, transform_indices = @transform_1, window_bounds = array<i64: 128, 128>}, {pipeline_mode = #tpu.pipeline_mode<synchronous>, transform_indices = @transform_2, window_bounds = array<i64: 1, 128>}, {transform_indices = @transform_3, window_bounds = array<i64: 200, 128>}]} {
    %c0 = arith.constant 0 : index
    %c0_0 = arith.constant 0 : index
    %0 = vector.load %arg1[%c0, %c0_0] : memref<200x128xbf16, #tpu.memory_space<vmem>>, vector<200x128xbf16>
    %c0_1 = arith.constant 0 : index
    %c0_2 = arith.constant 0 : index
    %1 = vector.load %arg2[%c0_1, %c0_2] : memref<128x128xbf16, #tpu.memory_space<vmem>>, vector<128x128xbf16>
    %cst = arith.constant dense<0.000000e+00> : vector<200x128xf32>
    %2 = tpu.matmul %0, %1, %cst {dimension_numbers = #tpu.dot_dimension_numbers<[1], [0], [0], [1], [0, 0, 1, 1], [], []>} : vector<200x128xbf16>, vector<128x128xbf16>, vector<200x128xf32> -> vector<200x128xf32>
    %c0_3 = arith.constant 0 : index
    %c0_4 = arith.constant 0 : index
    %3 = vector.load %arg3[%c0_3, %c0_4] : memref<1x128xf32, #tpu.memory_space<vmem>>, vector<1x128xf32>
    %4 = vector.broadcast %3 : vector<1x128xf32> to vector<200x128xf32>
    %5 = arith.addf %2, %4 : vector<200x128xf32>
    %cst_5 = arith.constant 2.000000e-02 : f32
    %6 = vector.broadcast %cst_5 : f32 to vector<200x128xf32>
    %7 = arith.mulf %6, %5 : vector<200x128xf32>
    %8 = arith.maximumf %5, %7 : vector<200x128xf32>
    %c0_6 = arith.constant 0 : index
    %c0_7 = arith.constant 0 : index
    %9 = vector.load %arg4[%c0_6, %c0_7] : memref<200x128xf32, #tpu.memory_space<vmem>>, vector<200x128xf32>
    tpu.vector_store %arg4[%c0_6, %c0_7], %8 {strides = array<i32>} : memref<200x128xf32, #tpu.memory_space<vmem>>, vector<200x128xf32>,
    return
  }
  func.func @transform_0(%arg0: i32) -> (i32, i32) {
    %c0_i32 = arith.constant 0 : i32
    %c0_i32_0 = arith.constant 0 : i32
    return %arg0, %c0_i32 : i32, i32
  }
  func.func @transform_1(%arg0: i32) -> (i32, i32) {
    %c0_i32 = arith.constant 0 : i32
    %c0_i32_0 = arith.constant 0 : i32
    %c0_i32_1 = arith.constant 0 : i32
    return %c0_i32, %c0_i32_0 : i32, i32
  }
  func.func @transform_2(%arg0: i32) -> (i32, i32) {
    %c0_i32 = arith.constant 0 : i32
    %c0_i32_0 = arith.constant 0 : i32
    %c0_i32_1 = arith.constant 0 : i32
    return %c0_i32, %c0_i32_0 : i32, i32
  }
  func.func @transform_3(%arg0: i32) -> (i32, i32) {
    %c0_i32 = arith.constant 0 : i32
    %c0_i32_0 = arith.constant 0 : i32
    return %arg0, %c0_i32 : i32, i32
  }
}

</mosaic_0001>

<llo_original>
// kernel: tpu_custom_call.1
$region0: #{tpu_custom_call.1}
  #allocation0 [shape = 'u32[]', space=smem, size = 0x4, offset = 0x4, fixed_abs, tag = 'smem constant byte address 0x4 - core index']
  #allocation1 [shape = 'u32[72,128]{1,0:T(1,128)}', space=vmem, size = 0x9000, scoped, tag = 'internal scratch']
  %s0 = inlined_call_operand.hbm [shape: bf16[200,128], index: 0, kind: input, shape index: {}]
  %s1 = inlined_call_operand.hbm [shape: bf16[128,128], index: 1, kind: input, shape index: {}]
  %s2 = inlined_call_operand.vmem [shape: f32[1,128], index: 2, kind: input, shape index: {}]
  %s3 = inlined_call_operand.hbm [shape: f32[200,128], index: 3, kind: output, shape index: {}]
  %s4 = sld [smem:[#allocation0]]
  $region30: #{tpu_custom_call.1} parent=0
    _
  %s6 = ssub.s32 1, %s4
  %s7 = scalar_select 0, %s6, %s4
  $region1: #{tpu_custom_call.1} parent=0
    #allocation2 [shape = 'u8[51200]{0}', space=vmem, size = 0xc800, scoped, tag = 'input window, operand 0, single buffered']
    #allocation3 [shape = 's32[1]{0}', space=sflag, size = 0x4, scoped, tag = 'scoped memory for tpu_custom_call.1']
    #allocation4 [shape = 's32[1]{0}', space=sflag, size = 0x4, scoped, tag = 'scoped memory for tpu_custom_call.1']
    #allocation5 [shape = 'u8[32768]{0}', space=vmem, size = 0x8000, scoped, tag = 'input window, operand 1, single buffered']
    #allocation6 [shape = 's32[1]{0}', space=sflag, size = 0x4, scoped, tag = 'scoped memory for tpu_custom_call.1']
    #allocation7 [shape = 'u8[102400]{0}', space=vmem, size = 0x19000, scoped, tag = 'output window, operand 0, single buffered']
    %8 = vsyncpa [#allocation3], 0
    %9 = vsyncpa [#allocation6], 0
    %10 = vsyncpa [#allocation4], 0
    // Predicated region
    $region2: #{tpu_custom_call.1} parent=1 // pred_check
      _
    $region3: #{tpu_custom_call.1} parent=1 // pred_check_branch
      %12 = sbr.rel (0) target = $region5
    $region4: #{tpu_custom_call.1} parent=1 // pred_region
      %14 = vsyncadd [#allocation3], 0
      %s15 = sshll.u32 %s0, 4
      %s16 = int_to_ptr.hbm [resolvable:$true] %s15
      %s17 = sshll.u32 [#allocation2], 4
      %s18 = int_to_ptr.vmem [resolvable:$true] %s17
      %23 = dma.hbm_to_vmem [thread:$0]  %s16, 1600, %s18, [#allocation3], 64, 64, 4
    $region5: #{tpu_custom_call.1} parent=1 // pred_fallthru
      _
    // Predicated region
    $region6: #{tpu_custom_call.1} parent=1 // pred_check
      _
    $region7: #{tpu_custom_call.1} parent=1 // pred_check_branch
      %25 = sbr.rel (0) target = $region9
    $region8: #{tpu_custom_call.1} parent=1 // pred_region
      %27 = vsyncadd [#allocation6], 0
      %s28 = sshll.u32 %s1, 4
      %s29 = int_to_ptr.hbm [resolvable:$true] %s28
      %s30 = sshll.u32 [#allocation5], 4
      %s31 = int_to_ptr.vmem [resolvable:$true] %s30
      %36 = dma.hbm_to_vmem [thread:$0]  %s29, 1024, %s31, [#allocation6], 64, 64, 4
    $region9: #{tpu_custom_call.1} parent=1 // pred_fallthru
      _
    // Predicated region
    $region10: #{tpu_custom_call.1} parent=1 // pred_check
      _
    $region11: #{tpu_custom_call.1} parent=1 // pred_check_branch
      %38 = sbr.rel (0) target = $region13
    $region12: #{tpu_custom_call.1} parent=1 // pred_region
      _
    $region13: #{tpu_custom_call.1} parent=1 // pred_fallthru
      _
    // Predicated region
    $region14: #{tpu_custom_call.1} parent=1 // pred_check
      _
    $region15: #{tpu_custom_call.1} parent=1 // pred_check_branch
      %40 = sbr.rel (0) target = $region17
    $region16: #{tpu_custom_call.1} parent=1 // pred_region
      %42 = dma.done [#allocation3], 1600
    $region17: #{tpu_custom_call.1} parent=1 // pred_fallthru
      _
    // Predicated region
    $region18: #{tpu_custom_call.1} parent=1 // pred_check
      _
    $region19: #{tpu_custom_call.1} parent=1 // pred_check_branch
      %44 = sbr.rel (0) target = $region21
    $region20: #{tpu_custom_call.1} parent=1 // pred_region
      %46 = dma.done [#allocation6], 1024
    $region21: #{tpu_custom_call.1} parent=1 // pred_fallthru
      _
    %v47 = vld [vmem:[#allocation2] sm:$0xf]
    %v48 = vld [vmem:[#allocation2 + $0x4] sm:$0xf]
    %v49 = vld [vmem:[#allocation2 + $0x8] sm:$0xf]
    %v50 = vld [vmem:[#allocation2 + $0xc] sm:$0xf]
    %v51 = vld [vmem:[#allocation2 + $0x10] sm:$0xf]
    %v52 = vld [vmem:[#allocation2 + $0x14] sm:$0xf]
    %v53 = vld [vmem:[#allocation2 + $0x18] sm:$0xf]
    %v54 = vld [vmem:[#allocation2 + $0x1c] sm:$0xf]
    %v55 = vld [vmem:[#allocation2 + $0x20] sm:$0xf]
    %v56 = vld [vmem:[#allocation2 + $0x24] sm:$0xf]
    %v57 = vld [vmem:[#allocation2 + $0x28] sm:$0xf]
    %v58 = vld [vmem:[#allocation2 + $0x2c] sm:$0xf]
    %v59 = vld [vmem:[#allocation2 + $0x30] sm:$0xf]
    %v60 = vld [vmem:[#allocation2 + $0x34] sm:$0xf]
    %v61 = vld [vmem:[#allocation2 + $0x38] sm:$0xf]
    %v62 = vld [vmem:[#allocation2 + $0x3c] sm:$0xf]
    %v63 = vld [vmem:[#allocation2 + $0x40] sm:$0xf]
    %v64 = vld [vmem:[#allocation2 + $0x44] sm:$0xf]
    %v65 = vld [vmem:[#allocation2 + $0x48] sm:$0xf]
    %v66 = vld [vmem:[#allocation2 + $0x4c] sm:$0xf]
    %v67 = vld [vmem:[#allocation2 + $0x50] sm:$0xf]
    %v68 = vld [vmem:[#allocation2 + $0x54] sm:$0xf]
    %v69 = vld [vmem:[#allocation2 + $0x58] sm:$0xf]
    %v70 = vld [vmem:[#allocation2 + $0x5c] sm:$0xf]
    %v71 = vld [vmem:[#allocation2 + $0x60] sm:$0xf]
    %v72 = vld [vmem:[#allocation5] sm:$0xf]
    %v73 = vld [vmem:[#allocation5 + $0x4] sm:$0xf]
    %v74 = vld [vmem:[#allocation5 + $0x8] sm:$0xf]
    %v75 = vld [vmem:[#allocation5 + $0xc] sm:$0xf]
    %v76 = vld [vmem:[#allocation5 + $0x10] sm:$0xf]
    %v77 = vld [vmem:[#allocation5 + $0x14] sm:$0xf]
    %v78 = vld [vmem:[#allocation5 + $0x18] sm:$0xf]
    %v79 = vld [vmem:[#allocation5 + $0x1c] sm:$0xf]
    %v80 = vld [vmem:[#allocation5 + $0x20] sm:$0xf]
    %v81 = vld [vmem:[#allocation5 + $0x24] sm:$0xf]
    %v82 = vld [vmem:[#allocation5 + $0x28] sm:$0xf]
    %v83 = vld [vmem:[#allocation5 + $0x2c] sm:$0xf]
    %v84 = vld [vmem:[#allocation5 + $0x30] sm:$0xf]
    %v85 = vld [vmem:[#allocation5 + $0x34] sm:$0xf]
    %v86 = vld [vmem:[#allocation5 + $0x38] sm:$0xf]
    %v87 = vld [vmem:[#allocation5 + $0x3c] sm:$0xf]
    %v88 = vld [vmem:[%s2] sm:$0x1]
    %v90 = vperm.slane %v88, 0
    %v117 = vunpack.c.l.b16 %v47
    %v118 = vunpack.c.l.b16 %v48
    %v119 = vunpack.c.l.b16 %v49
    %v120 = vunpack.c.l.b16 %v50
    %v121 = vunpack.c.l.b16 %v51
    %v122 = vunpack.c.l.b16 %v52
    %v123 = vunpack.c.l.b16 %v53
    %v124 = vunpack.c.l.b16 %v54
    %v125 = vunpack.c.l.b16 %v55
    %v126 = vunpack.c.l.b16 %v56
    %v127 = vunpack.c.l.b16 %v57
    %v128 = vunpack.c.l.b16 %v58
    %v129 = vunpack.c.l.b16 %v59
    %v130 = vunpack.c.l.b16 %v60
    %v131 = vunpack.c.l.b16 %v61
    %v132 = vunpack.c.l.b16 %v62
    %v133 = vunpack.c.l.b16 %v63
    %v134 = vunpack.c.l.b16 %v64
    %v135 = vunpack.c.l.b16 %v65
    %v136 = vunpack.c.l.b16 %v66
    %v137 = vunpack.c.l.b16 %v67
    %v138 = vunpack.c.l.b16 %v68
    %v139 = vunpack.c.l.b16 %v69
    %v140 = vunpack.c.l.b16 %v70
    %v141 = vunpack.c.l.b16 %v71
    %v142 = vpack.c.b16 %v118, %v117
    %v143 = vpack.c.b16 %v120, %v119
    %v144 = vpack.c.b16 %v122, %v121
    %v145 = vpack.c.b16 %v124, %v123
    %v146 = vpack.c.b16 %v126, %v125
    %v147 = vpack.c.b16 %v128, %v127
    %v148 = vpack.c.b16 %v130, %v129
    %v149 = vpack.c.b16 %v132, %v131
    %v150 = vpack.c.b16 %v134, %v133
    %v151 = vpack.c.b16 %v136, %v135
    %v152 = vpack.c.b16 %v138, %v137
    %v153 = vpack.c.b16 %v140, %v139
    %v154 = vpack.c.b16 %v141, %v141
    %v184 = vunpack.c.l.b16 %v72
    %v185 = vunpack.c.l.b16 %v73
    %v186 = vunpack.c.l.b16 %v74
    %v187 = vunpack.c.l.b16 %v75
    %v188 = vunpack.c.l.b16 %v76
    %v189 = vunpack.c.l.b16 %v77
    %v190 = vunpack.c.l.b16 %v78
    %v191 = vunpack.c.l.b16 %v79
    %v192 = vunpack.c.l.b16 %v80
    %v193 = vunpack.c.l.b16 %v81
    %v194 = vunpack.c.l.b16 %v82
    %v195 = vunpack.c.l.b16 %v83
    %v196 = vunpack.c.l.b16 %v84
    %v197 = vunpack.c.l.b16 %v85
    %v198 = vunpack.c.l.b16 %v86
    %v199 = vunpack.c.l.b16 %v87
    %v200 = vpack.c.b16 %v185, %v184
    %v201 = vpack.c.b16 %v187, %v186
    %v202 = vpack.c.b16 %v189, %v188
    %v203 = vpack.c.b16 %v191, %v190
    %v204 = vpack.c.b16 %v193, %v192
    %v205 = vpack.c.b16 %v195, %v194
    %v206 = vpack.c.b16 %v197, %v196
    %v207 = vpack.c.b16 %v199, %v198
    %216 = vmatpush.bf16.msra.mxu0 %v207
    %217 = vmatpush.bf16.msra.mxu0 %v206
    %218 = vmatpush.bf16.msra.mxu0 %v205
    %219 = vmatpush.bf16.msra.mxu0 %v204
    %220 = vmatpush.bf16.msra.mxu0 %v203
    %221 = vmatpush.bf16.msra.mxu0 %v202
    %222 = vmatpush.bf16.msra.mxu0 %v201
    %223 = vmatpush.bf16.msra.mxu0 %v200
    %224 = vmatmul.bf16.gmra.mxu0 %v142
    %v225 = vpop.f32.mrf.mxu0
    %v226 = vadd.f32 %v90, %v225
    %v227 = vpop.f32.mrf.mxu0
    %v228 = vadd.f32 %v90, %v227
    %229 = vmatmul.bf16.gmra.mxu0 %v143
    %v230 = vpop.f32.mrf.mxu0
    %v231 = vadd.f32 %v90, %v230
    %v232 = vpop.f32.mrf.mxu0
    %v233 = vadd.f32 %v90, %v232
    %234 = vmatmul.bf16.gmra.mxu0 %v144
    %v235 = vpop.f32.mrf.mxu0
    %v236 = vadd.f32 %v90, %v235
    %v237 = vpop.f32.mrf.mxu0
    %v238 = vadd.f32 %v90, %v237
    %239 = vmatmul.bf16.gmra.mxu0 %v145
    %v240 = vpop.f32.mrf.mxu0
    %v241 = vadd.f32 %v90, %v240
    %v242 = vpop.f32.mrf.mxu0
    %v243 = vadd.f32 %v90, %v242
    %244 = vmatmul.bf16.gmra.mxu0 %v146
    %v245 = vpop.f32.mrf.mxu0
    %v246 = vadd.f32 %v90, %v245
    %v247 = vpop.f32.mrf.mxu0
    %v248 = vadd.f32 %v90, %v247
    %249 = vmatmul.bf16.gmra.mxu0 %v147
    %v250 = vpop.f32.mrf.mxu0
    %v251 = vadd.f32 %v90, %v250
    %v252 = vpop.f32.mrf.mxu0
    %v253 = vadd.f32 %v90, %v252
    %254 = vmatmul.bf16.gmra.mxu0 %v148
    %v255 = vpop.f32.mrf.mxu0
    %v256 = vadd.f32 %v90, %v255
    %v257 = vpop.f32.mrf.mxu0
    %v258 = vadd.f32 %v90, %v257
    %259 = vmatmul.bf16.gmra.mxu0 %v149
    %v260 = vpop.f32.mrf.mxu0
    %v261 = vadd.f32 %v90, %v260
    %v262 = vpop.f32.mrf.mxu0
    %v263 = vadd.f32 %v90, %v262
    %264 = vmatmul.bf16.gmra.mxu0 %v150
    %v265 = vpop.f32.mrf.mxu0
    %v266 = vadd.f32 %v90, %v265
    %v267 = vpop.f32.mrf.mxu0
    %v268 = vadd.f32 %v90, %v267
    %269 = vmatmul.bf16.gmra.mxu0 %v151
    %v270 = vpop.f32.mrf.mxu0
    %v271 = vadd.f32 %v90, %v270
    %v272 = vpop.f32.mrf.mxu0
    %v273 = vadd.f32 %v90, %v272
    %274 = vmatmul.bf16.gmra.mxu0 %v152
    %v275 = vpop.f32.mrf.mxu0
    %v276 = vadd.f32 %v90, %v275
    %v277 = vpop.f32.mrf.mxu0
    %v278 = vadd.f32 %v90, %v277
    %279 = vmatmul.bf16.gmra.mxu0 %v153
    %v280 = vpop.f32.mrf.mxu0
    %v281 = vadd.f32 %v90, %v280
    %v282 = vpop.f32.mrf.mxu0
    %v283 = vadd.f32 %v90, %v282
    %284 = vmatmul.bf16.gmra.mxu0 %v154
    %v285 = vpop.f32.mrf.mxu0
    %v286 = vadd.f32 %v90, %v285
    %v287 = vpop.f32.mrf.mxu0
    %288 = vdwg.mxu0
    %v289 = vmul.f32 %v226, 0.02
    %v290 = vmul.f32 %v228, 0.02
    %v291 = vmul.f32 %v231, 0.02
    %v292 = vmul.f32 %v233, 0.02
    %v293 = vmul.f32 %v236, 0.02
    %v294 = vmul.f32 %v238, 0.02
    %v295 = vmul.f32 %v241, 0.02
    %v296 = vmul.f32 %v243, 0.02
    %v297 = vmul.f32 %v246, 0.02
    %v298 = vmul.f32 %v248, 0.02
    %v299 = vmul.f32 %v251, 0.02
    %v300 = vmul.f32 %v253, 0.02
    %v301 = vmul.f32 %v256, 0.02
    %v302 = vmul.f32 %v258, 0.02
    %v303 = vmul.f32 %v261, 0.02
    %v304 = vmul.f32 %v263, 0.02
    %v305 = vmul.f32 %v266, 0.02
    %v306 = vmul.f32 %v268, 0.02
    %v307 = vmul.f32 %v271, 0.02
    %v308 = vmul.f32 %v273, 0.02
    %v309 = vmul.f32 %v276, 0.02
    %v310 = vmul.f32 %v278, 0.02
    %v311 = vmul.f32 %v281, 0.02
    %v312 = vmul.f32 %v283, 0.02
    %v313 = vmul.f32 %v286, 0.02
    %v314 = vmax.f32 %v226, %v289
    %v315 = vmax.f32 %v228, %v290
    %v316 = vmax.f32 %v231, %v291
    %v317 = vmax.f32 %v233, %v292
    %v318 = vmax.f32 %v236, %v293
    %v319 = vmax.f32 %v238, %v294
    %v320 = vmax.f32 %v241, %v295
    %v321 = vmax.f32 %v243, %v296
    %v322 = vmax.f32 %v246, %v297
    %v323 = vmax.f32 %v248, %v298
    %v324 = vmax.f32 %v251, %v299
    %v325 = vmax.f32 %v253, %v300
    %v326 = vmax.f32 %v256, %v301
    %v327 = vmax.f32 %v258, %v302
    %v328 = vmax.f32 %v261, %v303
    %v329 = vmax.f32 %v263, %v304
    %v330 = vmax.f32 %v266, %v305
    %v331 = vmax.f32 %v268, %v306
    %v332 = vmax.f32 %v271, %v307
    %v333 = vmax.f32 %v273, %v308
    %v334 = vmax.f32 %v276, %v309
    %v335 = vmax.f32 %v278, %v310
    %v336 = vmax.f32 %v281, %v311
    %v337 = vmax.f32 %v283, %v312
    %v338 = vmax.f32 %v286, %v313
    %339 = vst [vmem:[#allocation7] sm:$0xff] %v314
    %340 = vst [vmem:[#allocation7 + $0x8] sm:$0xff] %v315
    %341 = vst [vmem:[#allocation7 + $0x10] sm:$0xff] %v316
    %342 = vst [vmem:[#allocation7 + $0x18] sm:$0xff] %v317
    %343 = vst [vmem:[#allocation7 + $0x20] sm:$0xff] %v318
    %344 = vst [vmem:[#allocation7 + $0x28] sm:$0xff] %v319
    %345 = vst [vmem:[#allocation7 + $0x30] sm:$0xff] %v320
    %346 = vst [vmem:[#allocation7 + $0x38] sm:$0xff] %v321
    %347 = vst [vmem:[#allocation7 + $0x40] sm:$0xff] %v322
    %348 = vst [vmem:[#allocation7 + $0x48] sm:$0xff] %v323
    %349 = vst [vmem:[#allocation7 + $0x50] sm:$0xff] %v324
    %350 = vst [vmem:[#allocation7 + $0x58] sm:$0xff] %v325
    %351 = vst [vmem:[#allocation7 + $0x60] sm:$0xff] %v326
    %352 = vst [vmem:[#allocation7 + $0x68] sm:$0xff] %v327
    %353 = vst [vmem:[#allocation7 + $0x70] sm:$0xff] %v328
    %354 = vst [vmem:[#allocation7 + $0x78] sm:$0xff] %v329
    %355 = vst [vmem:[#allocation7 + $0x80] sm:$0xff] %v330
    %356 = vst [vmem:[#allocation7 + $0x88] sm:$0xff] %v331
    %357 = vst [vmem:[#allocation7 + $0x90] sm:$0xff] %v332
    %358 = vst [vmem:[#allocation7 + $0x98] sm:$0xff] %v333
    %359 = vst [vmem:[#allocation7 + $0xa0] sm:$0xff] %v334
    %360 = vst [vmem:[#allocation7 + $0xa8] sm:$0xff] %v335
    %361 = vst [vmem:[#allocation7 + $0xb0] sm:$0xff] %v336
    %362 = vst [vmem:[#allocation7 + $0xb8] sm:$0xff] %v337
    %363 = vst [vmem:[#allocation7 + $0xc0] sm:$0xff] %v338
    // Predicated region
    $region22: #{tpu_custom_call.1} parent=1 // pred_check
      _
    $region23: #{tpu_custom_call.1} parent=1 // pred_check_branch
      %365 = sbr.rel (0) target = $region25
    $region24: #{tpu_custom_call.1} parent=1 // pred_region
      %367 = vsyncadd [#allocation4], 0
      %s368 = sshll.u32 [#allocation7], 4
      %s369 = int_to_ptr.vmem [resolvable:$true] %s368
      %s370 = sshll.u32 %s3, 4
      %s371 = int_to_ptr.hbm [resolvable:$true] %s370
      %376 = dma.vmem_to_hbm [thread:$0]  %s369, 3200, %s371, [#allocation4], 128, 128, 8
    $region25: #{tpu_custom_call.1} parent=1 // pred_fallthru
      _
    // Predicated region
    $region26: #{tpu_custom_call.1} parent=1 // pred_check
      _
    $region27: #{tpu_custom_call.1} parent=1 // pred_check_branch
      %378 = sbr.rel (0) target = $region29
    $region28: #{tpu_custom_call.1} parent=1 // pred_region
      %380 = dma.done [#allocation4], 3200
    $region29: #{tpu_custom_call.1} parent=1 // pred_fallthru
      _
    %381 = vsyncpa [#allocation3], 1
    %382 = vsyncpa [#allocation6], 1
    %383 = vsyncpa [#allocation4], 1

</llo_original>
